<compile_context>
chip_gen: v6e
topology: v6e:2x2x1
jax: 0.10.0
libtpu: 0.0.40
codegen_flags: <defaults>
</compile_context>

<pallas_src>
import math

import jax
import jax.numpy as jnp
from jax.experimental import pallas as pl
from jax.experimental.pallas import tpu as pltpu


def _copy_kernel(x_ref, o_ref):
    # Identity copy of one lane-dense tile — the only "work" of a reshape
    # when an explicit materialization is requested.
    o_ref[...] = x_ref[...]


def _sublane_multiple(dtype) -> int:
    # Sublane packing granularity: f32 -> 8, bf16 -> 16, int8/fp8 -> 32.
    itemsize = jnp.dtype(dtype).itemsize
    return {4: 8, 2: 16, 1: 32}.get(itemsize, 8)


def _vmem_capacity_bytes() -> int:
    # v5e/v6e: 128 MiB, v7x: 64 MiB per TensorCore.  Conservative fallback if
    # the query is unavailable (e.g. interpret mode).
    try:
        return int(pltpu.get_tpu_info().vmem_capacity_bytes)
    except Exception:
        return 64 * 1024 * 1024


def _pallas_identity_copy(x):
    """Tiled identity copy of `x`, returned as a lane-dense 2-D (rows, C) array.

    Writes a FRESH output buffer (no input/output aliasing).  Falls back to an
    explicit XLA copy when the element count is not a multiple of 128.
    """
    n = math.prod(x.shape)

    # Widest lane-dense last dimension (multiple of 128) that divides n.
    lane = None
    for c in (8192, 4096, 2048, 1024, 512, 256, 128):
        if n % c == 0:
            lane = c
            break
    if lane is None:
        # TODO(synk): non-128-divisible sizes use an XLA copy (a Pallas copy
        # kernel adds nothing for such ragged remainders).
        return jnp.copy(x)

    rows = n // lane
    x2d = jnp.reshape(x, (rows, lane))  # metadata-only

    itemsize = jnp.dtype(x.dtype).itemsize
    sub = _sublane_multiple(x.dtype)
    row_bytes = lane * itemsize

    vmem_cap = _vmem_capacity_bytes()
    # 2 input + 2 output pipeline buffers must fit in ~75% of physical VMEM.
    max_block_bytes = min(8 * 1024 * 1024, (vmem_cap * 3 // 4) // 4)

    if rows <= sub:
        # Tiny array: single full-extent block (always layout-legal).
        block_rows = rows
    else:
        block_rows = max(sub, (max_block_bytes // row_bytes) // sub * sub)
        block_rows = min(block_rows, (rows // sub) * sub)
        # Keep >= 8 grid steps when there is enough work, so v7x's two
        # TensorCores both get a share of the memory-bound copy.
        if rows >= 8 * sub:
            per_step = pl.cdiv(pl.cdiv(rows, 8), sub) * sub
            block_rows = max(sub, min(block_rows, per_step))

    grid = (pl.cdiv(rows, block_rows),)

    block_bytes = block_rows * row_bytes
    vmem_limit = max(32 * 1024 * 1024, 4 * block_bytes + (4 << 20))
    vmem_limit = min(vmem_limit, vmem_cap * 3 // 4)

    return pl.pallas_call(
        _copy_kernel,
        out_shape=jax.ShapeDtypeStruct((rows, lane), x.dtype),
        grid=grid,
        in_specs=[pl.BlockSpec((block_rows, lane), lambda i: (i, 0))],
        out_specs=pl.BlockSpec((block_rows, lane), lambda i: (i, 0)),
        compiler_params=pltpu.CompilerParams(
            dimension_semantics=("parallel",),
            vmem_limit_bytes=int(vmem_limit),
        ),
    )(x2d)


class Reshape:
    """JAX/Pallas equivalent of the PyTorch `reshape` nn.Module."""

    def __init__(self, *shape, materialize: bool = False):
        self.shape = tuple(shape)
        self.materialize = materialize

    def __call__(self, x):
        b = x.shape[0]
        f = math.prod(x.shape[1:])
        target_f = math.prod(self.shape)
        assert f == target_f, (
            f"cannot view input with {f} elements per batch item as shape "
            f"{self.shape} ({target_f} elements)"
        )

        if self.materialize:
            # Tiled Pallas copy into a fresh buffer, then metadata-only reshape.
            y = _pallas_identity_copy(x)
            return jnp.reshape(y, (b,) + self.shape)

        # Default / fast path: a reshape of a contiguous array is a
        # metadata-only bitcast — no kernel, no HBM traffic.
        return jnp.reshape(x, (b,) + self.shape)


if __name__ == "__main__":
    key = jax.random.PRNGKey(0)

    # ---- Test 1: small NCHW-style input (batch=2, channels=4, 16x16). ----
    x = jax.random.normal(key, (2, 4, 16, 16), dtype=jnp.float32)
    ref = jnp.reshape(x, (x.shape[0], 8, 128))  # == torch .view for contiguous

    y_fast = Reshape(8, 128)(x)
    y_pallas = Reshape(8, 128, materialize=True)(x)
    jax.block_until_ready(y_fast)
    jax.block_until_ready(y_pallas)
    for y in (y_fast, y_pallas):
        assert y.shape == (2, 8, 128), y.shape
        assert y.dtype == x.dtype
        assert bool(jnp.array_equal(y, ref))

    # ---- Test 2: row count not a multiple of the block -> cdiv partial block. ----
    key2 = jax.random.PRNGKey(1)
    x2 = jax.random.normal(key2, (2, 3, 40, 128), dtype=jnp.float32)  # 15360 / item
    ref2 = jnp.reshape(x2, (x2.shape[0], 120, 128))

    y2 = Reshape(120, 128, materialize=True)(x2)
    jax.block_until_ready(y2)
    assert y2.shape == (2, 120, 128), y2.shape
    assert bool(jnp.array_equal(y2, ref2))

    print("KERNEL_OK")
</pallas_src>

<mosaic_0001>
module attributes {stable_mosaic.version = 11 : i64} {
  func.func @_copy_kernel(%arg0: i32, %arg1: memref<1x2048xf32, #tpu.memory_space<vmem>>, %arg2: memref<1x2048xf32, #tpu.memory_space<vmem>>) attributes {dimension_semantics = [#tpu.dimension_semantics<parallel>], iteration_bounds = array<i64: 1>, scalar_prefetch = 0 : i64, scratch_operands = 0 : i64, tpu.core_type = #tpu.core_type<tc>, window_params = [{transform_indices = @transform_0, window_bounds = array<i64: 1, 2048>}, {transform_indices = @transform_1, window_bounds = array<i64: 1, 2048>}]} {
    %c0 = arith.constant 0 : index
    %c0_0 = arith.constant 0 : index
    %0 = vector.load %arg1[%c0, %c0_0] : memref<1x2048xf32, #tpu.memory_space<vmem>>, vector<1x2048xf32>
    %c0_1 = arith.constant 0 : index
    %c0_2 = arith.constant 0 : index
    %1 = vector.load %arg2[%c0_1, %c0_2] : memref<1x2048xf32, #tpu.memory_space<vmem>>, vector<1x2048xf32>
    tpu.vector_store %arg2[%c0_1, %c0_2], %0 {strides = array<i32>} : memref<1x2048xf32, #tpu.memory_space<vmem>>, vector<1x2048xf32>,
    return
  }
  func.func @transform_0(%arg0: i32) -> (i32, i32) {
    %c0_i32 = arith.constant 0 : i32
    %c0_i32_0 = arith.constant 0 : i32
    return %arg0, %c0_i32 : i32, i32
  }
  func.func @transform_1(%arg0: i32) -> (i32, i32) {
    %c0_i32 = arith.constant 0 : i32
    %c0_i32_0 = arith.constant 0 : i32
    return %arg0, %c0_i32 : i32, i32
  }
}

</mosaic_0001>

<llo_original>
// kernel: tpu_custom_call.1
$region0: #{tpu_custom_call.1}
  #allocation0 [shape = 'u32[]', space=smem, size = 0x4, offset = 0x4, fixed_abs, tag = 'smem constant byte address 0x4 - core index']
  #allocation1 [shape = 'u32[144,128]{1,0:T(1,128)}', space=vmem, size = 0x12000, scoped, tag = 'internal scratch']
  %s0 = inlined_call_operand.hbm [shape: f32[1,2048], index: 0, kind: input, shape index: {}]
  %s1 = inlined_call_operand.hbm [shape: f32[1,2048], index: 1, kind: output, shape index: {}]
  %s2 = sld [smem:[#allocation0]]
  $region18: #{tpu_custom_call.1} parent=0
    _
  %s4 = ssub.s32 1, %s2
  %s5 = scalar_select 0, %s4, %s2
  $region1: #{tpu_custom_call.1} parent=0
    #allocation2 [shape = 'u8[8192]{0}', space=vmem, size = 0x2000, scoped, tag = 'input window, operand 0, single buffered']
    #allocation3 [shape = 's32[1]{0}', space=sflag, size = 0x4, scoped, tag = 'scoped memory for tpu_custom_call.1']
    #allocation4 [shape = 's32[1]{0}', space=sflag, size = 0x4, scoped, tag = 'scoped memory for tpu_custom_call.1']
    #allocation5 [shape = 'u8[8192]{0}', space=vmem, size = 0x2000, scoped, tag = 'output window, operand 0, single buffered']
    %6 = vsyncpa [#allocation3], 0
    %7 = vsyncpa [#allocation4], 0
    // Predicated region
    $region2: #{tpu_custom_call.1} parent=1 // pred_check
      _
    $region3: #{tpu_custom_call.1} parent=1 // pred_check_branch
      %9 = sbr.rel (0) target = $region5
    $region4: #{tpu_custom_call.1} parent=1 // pred_region
      %s11 = ssub.s32 256, 256
      %12 = vsyncadd [#allocation3], %s11
      %s14 = sshll.u32 [#allocation2], 4
      %s15 = int_to_ptr.vmem [resolvable:$true] %s14
      %17 = dma.hbm_to_vmem [thread:$0]  %s0, 256, %s15, [#allocation3]
    $region5: #{tpu_custom_call.1} parent=1 // pred_fallthru
      _
    // Predicated region
    $region6: #{tpu_custom_call.1} parent=1 // pred_check
      _
    $region7: #{tpu_custom_call.1} parent=1 // pred_check_branch
      %19 = sbr.rel (0) target = $region9
    $region8: #{tpu_custom_call.1} parent=1 // pred_region
      %20 = dma.done [#allocation3], 256
    $region9: #{tpu_custom_call.1} parent=1 // pred_fallthru
      _
    %v21 = vld [vmem:[#allocation2] sm:$0xff]
    %v22 = vld [vmem:[#allocation2 + $0x8] sm:$0xff]
    %23 = vst [vmem:[#allocation5] sm:$0xff] %v21
    %24 = vst [vmem:[#allocation5 + $0x8] sm:$0xff] %v22
    // Predicated region
    $region10: #{tpu_custom_call.1} parent=1 // pred_check
      _
    $region11: #{tpu_custom_call.1} parent=1 // pred_check_branch
      %26 = sbr.rel (0) target = $region13
    $region12: #{tpu_custom_call.1} parent=1 // pred_region
      %s28 = ssub.s32 256, 256
      %29 = vsyncadd [#allocation4], %s28
      %s31 = sshll.u32 [#allocation5], 4
      %s32 = int_to_ptr.vmem [resolvable:$true] %s31
      %34 = dma.vmem_to_hbm [thread:$0]  %s32, 256, %s1, [#allocation4]
    $region13: #{tpu_custom_call.1} parent=1 // pred_fallthru
      _
    // Predicated region
    $region14: #{tpu_custom_call.1} parent=1 // pred_check
      _
    $region15: #{tpu_custom_call.1} parent=1 // pred_check_branch
      %36 = sbr.rel (0) target = $region17
    $region16: #{tpu_custom_call.1} parent=1 // pred_region
      %37 = dma.done [#allocation4], 256
    $region17: #{tpu_custom_call.1} parent=1 // pred_fallthru
      _
    %38 = vsyncpa [#allocation3], 1
    %39 = vsyncpa [#allocation4], 1

</llo_original>
